<compile_context>
chip_gen: v7x
topology: tpu7x:2x2x1
jax: 0.10.0
libtpu: 0.0.40
codegen_flags: <defaults>
</compile_context>

<pallas_src>
import jax
import jax.numpy as jnp
from jax.experimental import pallas as pl
from jax.experimental.pallas import tpu as pltpu


# -----------------------------------------------------------------------------
# Kernels
# -----------------------------------------------------------------------------
def _fr_compute_stats_kernel(x1_ref, x2_ref, w1_ref, w2_ref, y_ref, stats_ref):
    """Phase 1: ReLU + two 1x1-conv matmuls + per-tile BN partial statistics.

    x1_ref, x2_ref : (C_in, TS)      subsampled input rows for the two branches
    w1_ref, w2_ref : (C_half, C_in)  1x1 conv weights
    y_ref          : (2, C_half, TS) un-normalized conv outputs (f32)
    stats_ref      : (2, C_half, 2)  per-tile [sum, sum_of_squares] per channel
    """
    a1 = jnp.maximum(x1_ref[...], 0)   # ReLU commutes with stride-2 subsampling
    a2 = jnp.maximum(x2_ref[...], 0)

    y1 = jnp.dot(w1_ref[...], a1, preferred_element_type=jnp.float32)
    y2 = jnp.dot(w2_ref[...], a2, preferred_element_type=jnp.float32)

    # Two branches written to separate leading slots: no channel concat needed.
    y_ref[0] = y1
    y_ref[1] = y2

    s1 = jnp.sum(y1, axis=-1, keepdims=True)
    q1 = jnp.sum(y1 * y1, axis=-1, keepdims=True)
    s2 = jnp.sum(y2, axis=-1, keepdims=True)
    q2 = jnp.sum(y2 * y2, axis=-1, keepdims=True)
    stats_ref[0] = jnp.concatenate([s1, q1], axis=-1)
    stats_ref[1] = jnp.concatenate([s2, q2], axis=-1)


def _fr_normalize_kernel(y_ref, scale_ref, shift_ref, o_ref):
    """Phase 2: apply folded BatchNorm affine: out = y * scale + shift.

    y_ref   : (2, C_half, TS) f32
    scale_ref, shift_ref : (2, C_half, 1) f32 (broadcast along lanes)
    o_ref   : (2, C_half, TS)
    """
    o_ref[...] = (y_ref[...] * scale_ref[...] + shift_ref[...]).astype(o_ref.dtype)


# -----------------------------------------------------------------------------
# Tiling helpers
# -----------------------------------------------------------------------------
def _vmem_budget_bytes():
    # v7x has the smallest physical VMEM (64 MiB); parametrize when possible.
    cap = 64 * 1024 * 1024
    try:
        cap = int(pltpu.get_tpu_info().vmem_capacity_bytes)
    except Exception:
        pass
    return min(cap // 8, 8 * 1024 * 1024)


def _choose_tile_s(S, C_in, C_out, in_itemsize, budget_bytes):
    """Largest legal spatial tile that divides S and fits the VMEM budget."""
    # Per output position, per pipeline buffer: two input branches + f32 y tile.
    per_pos = 2 * C_in * in_itemsize + C_out * 4
    max_ts = max(128, budget_bytes // (2 * per_pos))   # x2: double-buffering
    if S <= max_ts:
        return S                       # full extent is always a legal lane block
    t = (max_ts // 128) * 128
    while t >= 128:
        if S % t == 0:                 # exact divisor => no padded rows in stats
            return t
        t -= 128
    return S                           # fallback: full extent (always legal)


# -----------------------------------------------------------------------------
# Wrapper
# -----------------------------------------------------------------------------
def factorized_reduce(x, w1, w2, gamma, beta, *, eps=1e-5, compute_dtype=None):
    """x: (N, C_in, H, W).  w1/w2: (C_out//2, C_in, 1, 1).  gamma/beta: (C_out,)."""
    N, C_in, H, W = x.shape
    C_half = w1.shape[0]
    C_out = 2 * C_half
    assert H % 2 == 0 and W % 2 == 0, "FactorizedReduce assumes even H, W"
    Ho, Wo = H // 2, W // 2
    S = Ho * Wo
    M = N * S
    if compute_dtype is None:
        compute_dtype = x.dtype

    # Stride-2 subsampling, kept in NCHW (no NHWC round-trip, no output transpose).
    x1 = x[:, :, 0::2, 0::2].reshape(N, C_in, S).astype(compute_dtype)  # conv_1 taps
    x2 = x[:, :, 1::2, 1::2].reshape(N, C_in, S).astype(compute_dtype)  # conv_2 taps
    w1m = w1[:, :, 0, 0].astype(compute_dtype)                          # (C_half, C_in)
    w2m = w2[:, :, 0, 0].astype(compute_dtype)

    ts = _choose_tile_s(S, C_in, C_out, jnp.dtype(compute_dtype).itemsize,
                        _vmem_budget_bytes())
    n_s = S // ts
    grid = (N, n_s)
    cparams = pltpu.CompilerParams(
        dimension_semantics=("parallel", "parallel"),
        vmem_limit_bytes=32 * 1024 * 1024)

    # ---- Phase 1: ReLU + matmuls + per-tile BN partial sums --------------------
    y, part = pl.pallas_call(
        _fr_compute_stats_kernel,
        grid=grid,
        in_specs=[
            pl.BlockSpec((None, C_in, ts), lambda n, s: (n, 0, s)),
            pl.BlockSpec((None, C_in, ts), lambda n, s: (n, 0, s)),
            pl.BlockSpec((C_half, C_in), lambda n, s: (0, 0)),
            pl.BlockSpec((C_half, C_in), lambda n, s: (0, 0)),
        ],
        out_shape=(
            jax.ShapeDtypeStruct((N, 2, C_half, S), jnp.float32),
            jax.ShapeDtypeStruct((N, n_s, 2, C_half, 2), jnp.float32),
        ),
        out_specs=(
            pl.BlockSpec((None, 2, C_half, ts), lambda n, s: (n, 0, 0, s)),
            pl.BlockSpec((None, None, 2, C_half, 2), lambda n, s: (n, s, 0, 0, 0)),
        ),
        compiler_params=cparams,
    )(x1, x2, w1m, w2m)

    # ---- Tiny global reduction + folded BN affine (C_out scalars) --------------
    sums = jnp.sum(part, axis=(0, 1))                 # (2, C_half, 2)
    mean = (sums[..., 0] / M).reshape(C_out)          # channel order == torch.cat order
    ex2 = (sums[..., 1] / M).reshape(C_out)
    var = jnp.maximum(ex2 - mean * mean, 0.0)         # biased variance (training mode)
    rstd = jax.lax.rsqrt(var + eps)
    g = gamma.astype(jnp.float32)
    b = beta.astype(jnp.float32)
    scale = (g * rstd).reshape(2, C_half, 1)
    shift = (b - mean * g * rstd).reshape(2, C_half, 1)
    # TODO(synk): running_mean/running_var buffer updates (training-time state)
    # are not part of the functional forward output and are omitted.

    # ---- Phase 2: normalize per tile -------------------------------------------
    out = pl.pallas_call(
        _fr_normalize_kernel,
        grid=grid,
        in_specs=[
            pl.BlockSpec((None, 2, C_half, ts), lambda n, s: (n, 0, 0, s)),
            pl.BlockSpec((2, C_half, 1), lambda n, s: (0, 0, 0)),
            pl.BlockSpec((2, C_half, 1), lambda n, s: (0, 0, 0)),
        ],
        out_shape=jax.ShapeDtypeStruct((N, 2, C_half, S), x.dtype),
        out_specs=pl.BlockSpec((None, 2, C_half, ts), lambda n, s: (n, 0, 0, s)),
        compiler_params=cparams,
    )(y, scale, shift)

    # (N, 2, C_half, S) -> (N, C_out, Ho, Wo): free reshape, channel order matches
    # torch.cat([conv_1(.), conv_2(.)], dim=1).
    return out.reshape(N, C_out, Ho, Wo)


# -----------------------------------------------------------------------------
# Pure-JAX reference
# -----------------------------------------------------------------------------
def _reference(x, w1, w2, gamma, beta, eps=1e-5):
    xr = jnp.maximum(x, 0.0)
    y1 = jnp.einsum("nchw,oc->nohw", xr[:, :, 0::2, 0::2], w1[:, :, 0, 0])
    y2 = jnp.einsum("nchw,oc->nohw", xr[:, :, 1::2, 1::2], w2[:, :, 0, 0])
    y = jnp.concatenate([y1, y2], axis=1)
    mean = y.mean(axis=(0, 2, 3), keepdims=True)
    var = jnp.square(y - mean).mean(axis=(0, 2, 3), keepdims=True)
    y_hat = (y - mean) / jnp.sqrt(var + eps)
    return y_hat * gamma.reshape(1, -1, 1, 1) + beta.reshape(1, -1, 1, 1)


if __name__ == "__main__":
    key = jax.random.PRNGKey(0)
    N, C_in, H, W = 2, 4, 16, 16
    C_out = 8                      # must be even; affine=True
    C_half = C_out // 2

    kx, kw1, kw2 = jax.random.split(key, 3)
    x = jax.random.normal(kx, (N, C_in, H, W), dtype=jnp.float32)
    # Conv2d(C_in, C_out//2, 1, stride=2, bias=False) weights: (C_half, C_in, 1, 1)
    w1 = 0.1 * jax.random.normal(kw1, (C_half, C_in, 1, 1), dtype=jnp.float32)
    w2 = 0.1 * jax.random.normal(kw2, (C_half, C_in, 1, 1), dtype=jnp.float32)
    # BatchNorm2d(C_out, affine=True) params at init: gamma=1, beta=0
    gamma = jnp.ones((C_out,), dtype=jnp.float32)
    beta = jnp.zeros((C_out,), dtype=jnp.float32)

    # f32 compute path: strict check against the reference.
    out = jax.block_until_ready(factorized_reduce(x, w1, w2, gamma, beta))
    ref = _reference(x, w1, w2, gamma, beta)
    assert out.shape == (N, C_out, H // 2, W // 2), out.shape
    err = float(jnp.max(jnp.abs(out - ref)))
    assert jnp.allclose(out, ref, atol=1e-4, rtol=1e-4), err

    # bf16 compute path (MXU-friendly inputs, f32 accumulation / BN stats):
    # compare against the reference evaluated on bf16-rounded inputs.
    out_b = jax.block_until_ready(
        factorized_reduce(x, w1, w2, gamma, beta, compute_dtype=jnp.bfloat16))
    xb = x.astype(jnp.bfloat16).astype(jnp.float32)
    w1b = w1.astype(jnp.bfloat16).astype(jnp.float32)
    w2b = w2.astype(jnp.bfloat16).astype(jnp.float32)
    ref_b = _reference(xb, w1b, w2b, gamma, beta)
    err_b = float(jnp.max(jnp.abs(out_b - ref_b)))
    assert jnp.allclose(out_b, ref_b, atol=1e-2, rtol=1e-2), err_b

    print("KERNEL_OK")
</pallas_src>

<mosaic_0001>
module attributes {stable_mosaic.version = 11 : i64} {
  func.func @_fr_compute_stats_kernel(%arg0: i32, %arg1: i32, %arg2: memref<1x4x64xf32, #tpu.memory_space<vmem>>, %arg3: memref<1x4x64xf32, #tpu.memory_space<vmem>>, %arg4: memref<4x4xf32, #tpu.memory_space<vmem>>, %arg5: memref<4x4xf32, #tpu.memory_space<vmem>>, %arg6: memref<1x2x4x64xf32, #tpu.memory_space<vmem>>, %arg7: memref<1x1x2x4x2xf32, #tpu.memory_space<vmem>>) attributes {dimension_semantics = [#tpu.dimension_semantics<parallel>, #tpu.dimension_semantics<parallel>], iteration_bounds = array<i64: 2, 1>, scalar_prefetch = 0 : i64, scratch_operands = 0 : i64, tpu.core_type = #tpu.core_type<tc>, window_params = [{transform_indices = @transform_0, window_bounds = array<i64: 1, 4, 64>}, {transform_indices = @transform_1, window_bounds = array<i64: 1, 4, 64>}, {pipeline_mode = #tpu.pipeline_mode<synchronous>, transform_indices = @transform_2, window_bounds = array<i64: 4, 4>}, {pipeline_mode = #tpu.pipeline_mode<synchronous>, transform_indices = @transform_3, window_bounds = array<i64: 4, 4>}, {transform_indices = @transform_4, window_bounds = array<i64: 1, 2, 4, 64>}, {transform_indices = @transform_5, window_bounds = array<i64: 1, 1, 2, 4, 2>}]} {
    %c0 = arith.constant 0 : index
    %c0_0 = arith.constant 0 : index
    %c0_1 = arith.constant 0 : index
    %0 = vector.load %arg2[%c0, %c0_0, %c0_1] : memref<1x4x64xf32, #tpu.memory_space<vmem>>, vector<1x4x64xf32>
    %1 = vector.shape_cast %0 : vector<1x4x64xf32> to vector<4x64xf32>
    %cst = arith.constant 0.000000e+00 : f32
    %2 = vector.broadcast %cst : f32 to vector<4x64xf32>
    %3 = arith.maximumf %1, %2 : vector<4x64xf32>
    %c0_2 = arith.constant 0 : index
    %c0_3 = arith.constant 0 : index
    %c0_4 = arith.constant 0 : index
    %4 = vector.load %arg3[%c0_2, %c0_3, %c0_4] : memref<1x4x64xf32, #tpu.memory_space<vmem>>, vector<1x4x64xf32>
    %5 = vector.shape_cast %4 : vector<1x4x64xf32> to vector<4x64xf32>
    %cst_5 = arith.constant 0.000000e+00 : f32
    %6 = vector.broadcast %cst_5 : f32 to vector<4x64xf32>
    %7 = arith.maximumf %5, %6 : vector<4x64xf32>
    %c0_6 = arith.constant 0 : index
    %c0_7 = arith.constant 0 : index
    %8 = vector.load %arg4[%c0_6, %c0_7] : memref<4x4xf32, #tpu.memory_space<vmem>>, vector<4x4xf32>
    %cst_8 = arith.constant dense<0.000000e+00> : vector<4x64xf32>
    %9 = tpu.matmul %8, %3, %cst_8 {dimension_numbers = #tpu.dot_dimension_numbers<[1], [0], [0], [1], [0, 0, 1, 1], [], []>} : vector<4x4xf32>, vector<4x64xf32>, vector<4x64xf32> -> vector<4x64xf32>
    %c0_9 = arith.constant 0 : index
    %c0_10 = arith.constant 0 : index
    %10 = vector.load %arg5[%c0_9, %c0_10] : memref<4x4xf32, #tpu.memory_space<vmem>>, vector<4x4xf32>
    %cst_11 = arith.constant dense<0.000000e+00> : vector<4x64xf32>
    %11 = tpu.matmul %10, %7, %cst_11 {dimension_numbers = #tpu.dot_dimension_numbers<[1], [0], [0], [1], [0, 0, 1, 1], [], []>} : vector<4x4xf32>, vector<4x64xf32>, vector<4x64xf32> -> vector<4x64xf32>
    %c0_12 = arith.constant 0 : index
    %c0_13 = arith.constant 0 : index
    %c0_14 = arith.constant 0 : index
    %c0_15 = arith.constant 0 : index
    %12 = vector.load %arg6[%c0_12, %c0_13, %c0_14, %c0_15] : memref<1x2x4x64xf32, #tpu.memory_space<vmem>>, vector<1x1x4x64xf32>
    %13 = vector.shape_cast %12 : vector<1x1x4x64xf32> to vector<4x64xf32>
    %14 = vector.shape_cast %9 : vector<4x64xf32> to vector<1x1x4x64xf32>
    tpu.vector_store %arg6[%c0_12, %c0_13, %c0_14, %c0_15], %14 {strides = array<i32>} : memref<1x2x4x64xf32, #tpu.memory_space<vmem>>, vector<1x1x4x64xf32>,
    %c0_16 = arith.constant 0 : index
    %c1 = arith.constant 1 : index
    %c0_17 = arith.constant 0 : index
    %c0_18 = arith.constant 0 : index
    %15 = vector.load %arg6[%c0_16, %c1, %c0_17, %c0_18] : memref<1x2x4x64xf32, #tpu.memory_space<vmem>>, vector<1x1x4x64xf32>
    %16 = vector.shape_cast %15 : vector<1x1x4x64xf32> to vector<4x64xf32>
    %17 = vector.shape_cast %11 : vector<4x64xf32> to vector<1x1x4x64xf32>
    tpu.vector_store %arg6[%c0_16, %c1, %c0_17, %c0_18], %17 {strides = array<i32>} : memref<1x2x4x64xf32, #tpu.memory_space<vmem>>, vector<1x1x4x64xf32>,
    %cst_19 = arith.constant dense<0.000000e+00> : vector<4xf32>
    %18 = vector.multi_reduction <add>, %9, %cst_19 [1] : vector<4x64xf32> to vector<4xf32>
    %19 = vector.shape_cast %18 : vector<4xf32> to vector<4x1xf32>
    %20 = arith.mulf %9, %9 : vector<4x64xf32>
    %cst_20 = arith.constant dense<0.000000e+00> : vector<4xf32>
    %21 = vector.multi_reduction <add>, %20, %cst_20 [1] : vector<4x64xf32> to vector<4xf32>
    %22 = vector.shape_cast %21 : vector<4xf32> to vector<4x1xf32>
    %cst_21 = arith.constant dense<0.000000e+00> : vector<4xf32>
    %23 = vector.multi_reduction <add>, %11, %cst_21 [1] : vector<4x64xf32> to vector<4xf32>
    %24 = vector.shape_cast %23 : vector<4xf32> to vector<4x1xf32>
    %25 = arith.mulf %11, %11 : vector<4x64xf32>
    %cst_22 = arith.constant dense<0.000000e+00> : vector<4xf32>
    %26 = vector.multi_reduction <add>, %25, %cst_22 [1] : vector<4x64xf32> to vector<4xf32>
    %27 = vector.shape_cast %26 : vector<4xf32> to vector<4x1xf32>
    %28 = tpu.concatenate %19, %22 in 1 : vector<4x1xf32>, vector<4x1xf32> -> vector<4x2xf32>
    %c0_23 = arith.constant 0 : index
    %c0_24 = arith.constant 0 : index
    %c0_25 = arith.constant 0 : index
    %c0_26 = arith.constant 0 : index
    %c0_27 = arith.constant 0 : index
    %29 = vector.load %arg7[%c0_23, %c0_24, %c0_25, %c0_26, %c0_27] : memref<1x1x2x4x2xf32, #tpu.memory_space<vmem>>, vector<1x1x1x4x2xf32>
    %30 = vector.shape_cast %29 : vector<1x1x1x4x2xf32> to vector<4x2xf32>
    %31 = vector.shape_cast %28 : vector<4x2xf32> to vector<1x1x1x4x2xf32>
    tpu.vector_store %arg7[%c0_23, %c0_24, %c0_25, %c0_26, %c0_27], %31 {strides = array<i32>} : memref<1x1x2x4x2xf32, #tpu.memory_space<vmem>>, vector<1x1x1x4x2xf32>,
    %32 = tpu.concatenate %24, %27 in 1 : vector<4x1xf32>, vector<4x1xf32> -> vector<4x2xf32>
    %c0_28 = arith.constant 0 : index
    %c0_29 = arith.constant 0 : index
    %c1_30 = arith.constant 1 : index
    %c0_31 = arith.constant 0 : index
    %c0_32 = arith.constant 0 : index
    %33 = vector.load %arg7[%c0_28, %c0_29, %c1_30, %c0_31, %c0_32] : memref<1x1x2x4x2xf32, #tpu.memory_space<vmem>>, vector<1x1x1x4x2xf32>
    %34 = vector.shape_cast %33 : vector<1x1x1x4x2xf32> to vector<4x2xf32>
    %35 = vector.shape_cast %32 : vector<4x2xf32> to vector<1x1x1x4x2xf32>
    tpu.vector_store %arg7[%c0_28, %c0_29, %c1_30, %c0_31, %c0_32], %35 {strides = array<i32>} : memref<1x1x2x4x2xf32, #tpu.memory_space<vmem>>, vector<1x1x1x4x2xf32>,
    return
  }
  func.func @transform_0(%arg0: i32, %arg1: i32) -> (i32, i32, i32) {
    %c0_i32 = arith.constant 0 : i32
    %c0_i32_0 = arith.constant 0 : i32
    return %arg0, %c0_i32, %arg1 : i32, i32, i32
  }
  func.func @transform_1(%arg0: i32, %arg1: i32) -> (i32, i32, i32) {
    %c0_i32 = arith.constant 0 : i32
    %c0_i32_0 = arith.constant 0 : i32
    return %arg0, %c0_i32, %arg1 : i32, i32, i32
  }
  func.func @transform_2(%arg0: i32, %arg1: i32) -> (i32, i32) {
    %c0_i32 = arith.constant 0 : i32
    %c0_i32_0 = arith.constant 0 : i32
    %c0_i32_1 = arith.constant 0 : i32
    return %c0_i32, %c0_i32_0 : i32, i32
  }
  func.func @transform_3(%arg0: i32, %arg1: i32) -> (i32, i32) {
    %c0_i32 = arith.constant 0 : i32
    %c0_i32_0 = arith.constant 0 : i32
    %c0_i32_1 = arith.constant 0 : i32
    return %c0_i32, %c0_i32_0 : i32, i32
  }
  func.func @transform_4(%arg0: i32, %arg1: i32) -> (i32, i32, i32, i32) {
    %c0_i32 = arith.constant 0 : i32
    %c0_i32_0 = arith.constant 0 : i32
    %c0_i32_1 = arith.constant 0 : i32
    return %arg0, %c0_i32, %c0_i32_0, %arg1 : i32, i32, i32, i32
  }
  func.func @transform_5(%arg0: i32, %arg1: i32) -> (i32, i32, i32, i32, i32) {
    %c0_i32 = arith.constant 0 : i32
    %c0_i32_0 = arith.constant 0 : i32
    %c0_i32_1 = arith.constant 0 : i32
    %c0_i32_2 = arith.constant 0 : i32
    return %arg0, %arg1, %c0_i32, %c0_i32_0, %c0_i32_1 : i32, i32, i32, i32, i32
  }
}

</mosaic_0001>

<llo_original>
// kernel: tpu_custom_call.1
$region0: #{tpu_custom_call.1}
  #allocation0 [shape = 'u32[]', space=smem, size = 0x4, offset = 0x4, fixed_abs, tag = 'smem constant byte address 0x4 - core index']
  #allocation1 [shape = 'u32[144,128]{1,0:T(1,128)}', space=vmem, size = 0x12000, scoped, tag = 'internal scratch']
  %s0 = inlined_call_operand.hbm [shape: f32[2,4,64], index: 0, kind: input, shape index: {}]
  %s1 = inlined_call_operand.hbm [shape: f32[2,4,64], index: 1, kind: input, shape index: {}]
  %s2 = inlined_call_operand.vmem [shape: f32[4,4], index: 2, kind: input, shape index: {}]
  %s3 = inlined_call_operand.vmem [shape: f32[4,4], index: 3, kind: input, shape index: {}]
  %s4 = inlined_call_operand.hbm [shape: f32[2,2,4,64], index: 4, kind: output, shape index: {0}]
  %s5 = inlined_call_operand.vmem [shape: f32[2,1,2,4,2], index: 5, kind: output, shape index: {1}]
  %6 = xla_tuple %s4, %s5
  %s7 = sld [smem:[#allocation0]]
  $region65: #{tpu_custom_call.1} parent=0
    _
  %s9 = ssub.s32 1, %s7
  %s10 = scalar_select 0, %s9, %s7
  $region1: #{tpu_custom_call.1} parent=0
    #allocation2 [shape = 'u8[4096]{0}', space=vmem, size = 0x1000, scoped, tag = 'input window, operand 0']
    #allocation3 [shape = 's32[2]{0}', space=sflag, size = 0x8, scoped, tag = 'scoped memory for tpu_custom_call.1']
    #allocation4 [shape = 's32[2]{0}', space=sflag, size = 0x8, scoped, tag = 'scoped memory for tpu_custom_call.1']
    #allocation5 [shape = 'u8[4096]{0}', space=vmem, size = 0x1000, scoped, tag = 'input window, operand 1']
    #allocation6 [shape = 's32[2]{0}', space=sflag, size = 0x8, scoped, tag = 'scoped memory for tpu_custom_call.1']
    #allocation7 [shape = 'u8[8192]{0}', space=vmem, size = 0x2000, scoped, tag = 'output window, operand 0']
    %11 = vsyncpa [#allocation3], 0
    %s12 = scalar_lea.sflag [#allocation3], 1
    %13 = vsyncpa %s12, 0
    %14 = vsyncpa [#allocation6], 0
    %s15 = scalar_lea.sflag [#allocation6], 1
    %16 = vsyncpa %s15, 0
    %17 = vsyncpa [#allocation4], 0
    %s18 = scalar_lea.sflag [#allocation4], 1
    %19 = vsyncpa %s18, 0
    loop: start=0, step=1, limit=4
    $region2: #{tpu_custom_call.1} parent=1 // loop_pre_header
      _
    $region3: #{tpu_custom_call.1} parent=1 // loop_header
      %s21 = sphi 0, %s25
      %p22 = scmp.ge.s32.totalorder %s21, 4
      %s28 = sphi 0, %s40
      %s29 = sphi 0, %s36
      %s30 = sphi 0, %s28
      %s31 = sphi 0, %s29
      %s32 = sphi 0, %s30
      %s33 = sphi 0, %s31
      %s45 = sphi 0, %s47
      %s48 = sphi 0, %s45
      %s49 = sphi 0, %s48
      %s65 = sphi 0, %s49
      %s73 = sphi 0, %s75
      %s76 = sphi 0, %s73
      %s77 = sphi 0, %s76
      %s93 = sphi 0, %s77
      %s97 = sphi 0, %s97
      %s99 = sphi 0, %s97
      %s100 = sphi 0, %s99
      %s114 = sphi 0, %s100
      %s118 = sphi 0, %s118
      %s120 = sphi 0, %s118
      %s121 = sphi 0, %s120
      %s135 = sphi 0, %s121
      %s143 = sphi 0, %s145
      %s146 = sphi 0, %s143
      %s147 = sphi 0, %s146
      %s163 = sphi 0, %s147
      %s171 = sphi 0, %s173
      %s174 = sphi 0, %s171
      %s175 = sphi 0, %s174
      %s191 = sphi 0, %s175
    $region4: #{tpu_custom_call.1} parent=1 // loop_header_branch
      %24 = sbr.rel (%p22) target = $region8
    $region5: #{tpu_custom_call.1} parent=1 // loop_body
      %s26 = ssub.s32 %s21, 1
      %s27 = ssub.s32 %s21, 2
      %s34 = sadd.s32 1, %s29
      %p35 = scmp.ge.s32.totalorder %s34, 1
      %s36 = scalar_select %p35, 0, %s34
      %s37 = sadd.s32 1, %s28
      %s38 = scalar_select %p35, %s37, %s28
      %p39 = scmp.ge.s32.totalorder %s38, 2
      %s40 = scalar_select %p39, 0, %s38
      %s41 = ssub.s32 %s28, %s40
      %s42 = ssub.s32 %s29, %s36
      %s43 = sor.u32 %s41, %s42
      %p44 = scmp.eq.s32.totalorder %s43, 0
      %s46 = sadd.s32 %s45, 1
      %s47 = scalar_select %p44, %s45, %s46
      %p50 = pneg %p44
      %p51 = scmp.eq.s32.totalorder %s21, 1
      %p52 = por %p50, %p51
      %p53 = scmp.ne.s32.totalorder %s45, %s48
      %p54 = scmp.eq.s32.totalorder %s21, 0
      %p55 = por %p53, %p54
      %p56 = scmp.ne.s32.totalorder %s45, %s48
      %p57 = scmp.eq.s32.totalorder %s26, 1
      %p58 = por %p56, %p57
      %p59 = scmp.ne.s32.totalorder %s48, %s49
      %p60 = scmp.eq.s32.totalorder %s26, 0
      %p61 = por %p59, %p60
      %p62 = scmp.ne.s32.totalorder %s48, %s49
      %p63 = scmp.eq.s32.totalorder %s27, 1
      %p64 = por %p62, %p63
      %p66 = scmp.ne.s32.totalorder %s49, %s65
      %p67 = scmp.eq.s32.totalorder %s27, 0
      %p68 = por %p66, %p67
      %s69 = ssub.s32 %s28, %s40
      %s70 = ssub.s32 %s29, %s36
      %s71 = sor.u32 %s69, %s70
      %p72 = scmp.eq.s32.totalorder %s71, 0
      %s74 = sadd.s32 %s73, 1
      %s75 = scalar_select %p72, %s73, %s74
      %p78 = pneg %p72
      %p79 = scmp.eq.s32.totalorder %s21, 1
      %p80 = por %p78, %p79
      %p81 = scmp.ne.s32.totalorder %s73, %s76
      %p82 = scmp.eq.s32.totalorder %s21, 0
      %p83 = por %p81, %p82
      %p84 = scmp.ne.s32.totalorder %s73, %s76
      %p85 = scmp.eq.s32.totalorder %s26, 1
      %p86 = por %p84, %p85
      %p87 = scmp.ne.s32.totalorder %s76, %s77
      %p88 = scmp.eq.s32.totalorder %s26, 0
      %p89 = por %p87, %p88
      %p90 = scmp.ne.s32.totalorder %s76, %s77
      %p91 = scmp.eq.s32.totalorder %s27, 1
      %p92 = por %p90, %p91
      %p94 = scmp.ne.s32.totalorder %s77, %s93
      %p95 = scmp.eq.s32.totalorder %s27, 0
      %p96 = por %p94, %p95
      %s98 = sadd.s32 %s97, 1
      %p101 = scmp.eq.s32.totalorder %s21, 1
      %p102 = scmp.ne.s32.totalorder %s97, %s99
      %p103 = scmp.eq.s32.totalorder %s21, 0
      %p104 = por %p102, %p103
      %p105 = scmp.ne.s32.totalorder %s97, %s99
      %p106 = scmp.eq.s32.totalorder %s26, 1
      %p107 = por %p105, %p106
      %p108 = scmp.ne.s32.totalorder %s99, %s100
      %p109 = scmp.eq.s32.totalorder %s26, 0
      %p110 = por %p108, %p109
      %p111 = scmp.ne.s32.totalorder %s99, %s100
      %p112 = scmp.eq.s32.totalorder %s27, 1
      %p113 = por %p111, %p112
      %p115 = scmp.ne.s32.totalorder %s100, %s114
      %p116 = scmp.eq.s32.totalorder %s27, 0
      %p117 = por %p115, %p116
      %s119 = sadd.s32 %s118, 1
      %p122 = scmp.eq.s32.totalorder %s21, 1
      %p123 = scmp.ne.s32.totalorder %s118, %s120
      %p124 = scmp.eq.s32.totalorder %s21, 0
      %p125 = por %p123, %p124
      %p126 = scmp.ne.s32.totalorder %s118, %s120
      %p127 = scmp.eq.s32.totalorder %s26, 1
      %p128 = por %p126, %p127
      %p129 = scmp.ne.s32.totalorder %s120, %s121
      %p130 = scmp.eq.s32.totalorder %s26, 0
      %p131 = por %p129, %p130
      %p132 = scmp.ne.s32.totalorder %s120, %s121
      %p133 = scmp.eq.s32.totalorder %s27, 1
      %p134 = por %p132, %p133
      %p136 = scmp.ne.s32.totalorder %s121, %s135
      %p137 = scmp.eq.s32.totalorder %s27, 0
      %p138 = por %p136, %p137
      %s139 = ssub.s32 %s28, %s40
      %s140 = ssub.s32 %s29, %s36
      %s141 = sor.u32 %s139, %s140
      %p142 = scmp.eq.s32.totalorder %s141, 0
      %s144 = sadd.s32 %s143, 1
      %s145 = scalar_select %p142, %s143, %s144
      %p148 = pneg %p142
      %p149 = scmp.eq.s32.totalorder %s21, 1
      %p150 = por %p148, %p149
      %p151 = scmp.ne.s32.totalorder %s143, %s146
      %p152 = scmp.eq.s32.totalorder %s21, 0
      %p153 = por %p151, %p152
      %p154 = scmp.ne.s32.totalorder %s143, %s146
      %p155 = scmp.eq.s32.totalorder %s26, 1
      %p156 = por %p154, %p155
      %p157 = scmp.ne.s32.totalorder %s146, %s147
      %p158 = scmp.eq.s32.totalorder %s26, 0
      %p159 = por %p157, %p158
      %p160 = scmp.ne.s32.totalorder %s146, %s147
      %p161 = scmp.eq.s32.totalorder %s27, 1
      %p162 = por %p160, %p161
      %p164 = scmp.ne.s32.totalorder %s147, %s163
      %p165 = scmp.eq.s32.totalorder %s27, 0
      %p166 = por %p164, %p165
      %s167 = ssub.s32 %s28, %s40
      %s168 = ssub.s32 %s29, %s36
      %s169 = sor.u32 %s167, %s168
      %p170 = scmp.eq.s32.totalorder %s169, 0
      %s172 = sadd.s32 %s171, 1
      %s173 = scalar_select %p170, %s171, %s172
      %p176 = pneg %p170
      %p177 = scmp.eq.s32.totalorder %s21, 1
      %p178 = por %p176, %p177
      %p179 = scmp.ne.s32.totalorder %s171, %s174
      %p180 = scmp.eq.s32.totalorder %s21, 0
      %p181 = por %p179, %p180
      %p182 = scmp.ne.s32.totalorder %s171, %s174
      %p183 = scmp.eq.s32.totalorder %s26, 1
      %p184 = por %p182, %p183
      %p185 = scmp.ne.s32.totalorder %s174, %s175
      %p186 = scmp.eq.s32.totalorder %s26, 0
      %p187 = por %p185, %p186
      %p188 = scmp.ne.s32.totalorder %s174, %s175
      %p189 = scmp.eq.s32.totalorder %s27, 1
      %p190 = por %p188, %p189
      %p192 = scmp.ne.s32.totalorder %s175, %s191
      %p193 = scmp.eq.s32.totalorder %s27, 0
      %p194 = por %p192, %p193
      %p195 = scmp.le.s32.totalorder 1, %s21
      %p196 = scmp.lt.s32.totalorder %s21, 3
      %p197 = pnand %p195, %p196
      %p198 = pneg %p197
      // Predicated region
      $region9: #{tpu_custom_call.1} parent=5 // pred_check
        _
      $region10: #{tpu_custom_call.1} parent=5 // pred_check_branch
        %200 = sbr.rel (%p197) target = $region12
      $region11: #{tpu_custom_call.1} parent=5 // pred_region
        %s201 = ssub.s32 %s21, 1
        // Predicated region
        $region13: #{tpu_custom_call.1} parent=11 // pred_check
          %p202 = pneg %p110
        $region14: #{tpu_custom_call.1} parent=11 // pred_check_branch
          %204 = sbr.rel (%p202) target = $region16
        $region15: #{tpu_custom_call.1} parent=11 // pred_region
          _
        $region16: #{tpu_custom_call.1} parent=11 // pred_fallthru
          _
        // Predicated region
        $region17: #{tpu_custom_call.1} parent=11 // pred_check
          %p205 = pneg %p131
        $region18: #{tpu_custom_call.1} parent=11 // pred_check_branch
          %207 = sbr.rel (%p205) target = $region20
        $region19: #{tpu_custom_call.1} parent=11 // pred_region
          _
        $region20: #{tpu_custom_call.1} parent=11 // pred_fallthru
          _
      $region12: #{tpu_custom_call.1} parent=5 // pred_fallthru
        _
      %p208 = scmp.lt.s32.totalorder %s21, 2
      // Predicated region
      $region21: #{tpu_custom_call.1} parent=5 // pred_check
        %p209 = pneg %p208
      $region22: #{tpu_custom_call.1} parent=5 // pred_check_branch
        %211 = sbr.rel (%p209) target = $region24
      $region23: #{tpu_custom_call.1} parent=5 // pred_region
        // Predicated region
        $region25: #{tpu_custom_call.1} parent=23 // pred_check
          %p212 = pneg %p55
        $region26: #{tpu_custom_call.1} parent=23 // pred_check_branch
          %214 = sbr.rel (%p212) target = $region28
        $region27: #{tpu_custom_call.1} parent=23 // pred_region
          %s215 = sand.u32 %s45, 1
          %s216 = scalar_lea.sflag [#allocation3], %s215
          %s217 = sand.u32 %s45, 1
          %s218 = smul.addr %s217, 4
          %s219 = scalar_lea.vmem [#allocation2], %s218
          %s221 = ssub.s32 64, 64
          %222 = vsyncadd %s216, %s221
          %s223 = sadd.s32 %s29, %s28
          %s224 = smul.addr %s223, 64
          %s225 = scalar_lea.hbm %s0, %s224
          %s227 = sshll.u32 %s219, 4
          %s228 = int_to_ptr.vmem [resolvable:$true] %s227
          %230 = dma.hbm_to_vmem [thread:$0]  %s225, 64, %s228, %s216
        $region28: #{tpu_custom_call.1} parent=23 // pred_fallthru
          _
        // Predicated region
        $region29: #{tpu_custom_call.1} parent=23 // pred_check
          %p231 = pneg %p83
        $region30: #{tpu_custom_call.1} parent=23 // pred_check_branch
          %233 = sbr.rel (%p231) target = $region32
        $region31: #{tpu_custom_call.1} parent=23 // pred_region
          %s234 = sand.u32 %s73, 1
          %s235 = scalar_lea.sflag [#allocation6], %s234
          %s236 = sand.u32 %s73, 1
          %s237 = smul.addr %s236, 4
          %s238 = scalar_lea.vmem [#allocation5], %s237
          %s240 = ssub.s32 64, 64
          %241 = vsyncadd %s235, %s240
          %s242 = sadd.s32 %s29, %s28
          %s243 = smul.addr %s242, 64
          %s244 = scalar_lea.hbm %s1, %s243
          %s246 = sshll.u32 %s238, 4
          %s247 = int_to_ptr.vmem [resolvable:$true] %s246
          %249 = dma.hbm_to_vmem [thread:$0]  %s244, 64, %s247, %s235
        $region32: #{tpu_custom_call.1} parent=23 // pred_fallthru
          _
      $region24: #{tpu_custom_call.1} parent=5 // pred_fallthru
        _
      %p250 = scmp.le.s32.totalorder 1, %s21
      %p251 = scmp.lt.s32.totalorder %s21, 3
      %p252 = pnand %p250, %p251
      %p253 = pneg %p252
      // Predicated region
      $region33: #{tpu_custom_call.1} parent=5 // pred_check
        _
      $region34: #{tpu_custom_call.1} parent=5 // pred_check_branch
        %255 = sbr.rel (%p252) target = $region36
      $region35: #{tpu_custom_call.1} parent=5 // pred_region
        %s256 = ssub.s32 %s21, 1
        %s257 = sand.u32 %s48, 1
        %s258 = scalar_lea.sflag [#allocation3], %s257
        %s259 = sand.u32 %s48, 1
        %s260 = smul.addr %s259, 4
        %s261 = scalar_lea.vmem [#allocation2], %s260
        // Predicated region
        $region37: #{tpu_custom_call.1} parent=35 // pred_check
          %p262 = pneg %p61
        $region38: #{tpu_custom_call.1} parent=35 // pred_check_branch
          %264 = sbr.rel (%p262) target = $region40
        $region39: #{tpu_custom_call.1} parent=35 // pred_region
          %265 = dma.done %s258, 64
        $region40: #{tpu_custom_call.1} parent=35 // pred_fallthru
          _
        %s266 = sand.u32 %s76, 1
        %s267 = scalar_lea.sflag [#allocation6], %s266
        %s268 = sand.u32 %s76, 1
        %s269 = smul.addr %s268, 4
        %s270 = scalar_lea.vmem [#allocation5], %s269
        // Predicated region
        $region41: #{tpu_custom_call.1} parent=35 // pred_check
          %p271 = pneg %p89
        $region42: #{tpu_custom_call.1} parent=35 // pred_check_branch
          %273 = sbr.rel (%p271) target = $region44
        $region43: #{tpu_custom_call.1} parent=35 // pred_region
          %274 = dma.done %s267, 64
        $region44: #{tpu_custom_call.1} parent=35 // pred_fallthru
          _
        %s275 = sand.u32 %s48, 1
        %s276 = scalar_lea.sflag [#allocation3], %s275
        %s277 = sand.u32 %s48, 1
        %s278 = smul.addr %s277, 4
        %s279 = scalar_lea.vmem [#allocation2], %s278
        %p280 = pneg %p61
        %p281 = pneg %p58
        %s282 = sand.u32 %s76, 1
        %s283 = scalar_lea.sflag [#allocation6], %s282
        %s284 = sand.u32 %s76, 1
        %s285 = smul.addr %s284, 4
        %s286 = scalar_lea.vmem [#allocation5], %s285
        %p287 = pneg %p89
        %p288 = pneg %p86
        %p289 = pneg %p110
        %p290 = pneg %p107
        %p291 = pneg %p131
        %p292 = pneg %p128
        %p293 = pneg %p159
        %p294 = pneg %p156
        %s295 = sand.u32 %s146, 1
        %s296 = scalar_lea.sflag [#allocation4], %s295
        %s297 = sand.u32 %s146, 1
        %s298 = smul.addr %s297, 8
        %s299 = scalar_lea.vmem [#allocation7], %s298
        %p300 = pneg %p187
        %p301 = pneg %p184
        %p302 = scmp.lt.s32.totalorder %s30, 1
        %s303 = scalar_select %p302, %s30, 1
        %p304 = scmp.lt.s32.totalorder %s31, 0
        %s305 = scalar_select %p304, %s31, 0
        %s306 = smul.addr %s305, 2
        %s307 = smul.addr %s303, 2
        %s308 = sadd.s32 %s306, %s307
        %s309 = smul.addr %s308, 4
        %s310 = scalar_lea.vmem %s5, %s309
        %p311 = scmp.lt.s32.totalorder %s30, 1
        %s312 = scalar_select %p311, %s30, 1
        %p313 = scmp.lt.s32.totalorder %s31, 0
        %s314 = scalar_select %p313, %s31, 0
        %s315 = smul.addr %s314, 2
        %s316 = smul.addr %s312, 2
        %s317 = sadd.s32 %s315, %s316
        %s318 = smul.addr %s317, 4
        %s319 = scalar_lea.vmem %s5, %s318
        %v320 = vld [vmem:[%s261] sm:$0xf]
        %v321 = vmax.f32 %v320, 0.0
        %v322 = vld [vmem:[%s270] sm:$0xf]
        %v323 = vmax.f32 %v322, 0.0
        %v324 = vld [vmem:[%s2] sm:$0xf]
        %vm325 = vcmask 31744
        %v327 = vsel %vm325, %v324, 0
        %vm329 = vcmask 1043456
        %v331 = vsel %vm329, %v321, 0
        %333 = vmatprep.subr.mxu0 0.0
        %334 = vmatpush1.msra.mxu0 %v331
        %335 = vmatprep.subr.mxu0 0.0
        %336 = vmatpush1.msra.mxu0 0.0
        %337 = vmatprep.subr.mxu0 0.0
        %338 = vmatpush1.msra.mxu0 0.0
        %339 = vmatprep.subr.mxu0 0.0
        %340 = vmatpush1.msra.mxu0 0.0
        %341 = vmatprep.subr.mxu0 0.0
        %342 = vmatpush1.msra.mxu0 0.0
        %343 = vmatprep.subr.mxu0 0.0
        %344 = vmatpush1.msra.mxu0 0.0
        %345 = vmatprep.subr.mxu0 0.0
        %346 = vmatpush1.msra.mxu0 0.0
        %347 = vmatprep.subr.mxu0 0.0
        %348 = vmatpush1.msra.mxu0 0.0
        %349 = vmatprep.subr.mxu0 0.0
        %350 = vmatpush1.msra.mxu0 0.0
        %351 = vmatprep.subr.mxu0 0.0
        %352 = vmatpush1.msra.mxu0 0.0
        %353 = vmatprep.subr.mxu0 0.0
        %354 = vmatpush1.msra.mxu0 0.0
        %355 = vmatprep.subr.mxu0 0.0
        %356 = vmatpush1.msra.mxu0 0.0
        %357 = vmatprep.subr.mxu0 0.0
        %358 = vmatpush1.msra.mxu0 0.0
        %359 = vmatprep.subr.mxu0 0.0
        %360 = vmatpush1.msra.mxu0 0.0
        %361 = vmatprep.subr.mxu0 0.0
        %362 = vmatpush1.msra.mxu0 0.0
        %363 = vmatprep.subr.mxu0 0.0
        %364 = vmatpush1.msra.mxu0 0.0
        %365 = vmatprep.subr.mxu0 0.0
        %366 = vmatpush1.msra.mxu0 0.0
        %367 = vmatprep.subr.mxu0 0.0
        %368 = vmatpush1.msra.mxu0 0.0
        %369 = vmatprep.subr.mxu0 0.0
        %370 = vmatpush1.msra.mxu0 0.0
        %371 = vmatprep.subr.mxu0 0.0
        %372 = vmatpush1.msra.mxu0 0.0
        %373 = vmatprep.subr.mxu0 0.0
        %374 = vmatpush1.msra.mxu0 0.0
        %375 = vmatprep.subr.mxu0 0.0
        %376 = vmatpush1.msra.mxu0 0.0
        %377 = vmatprep.subr.mxu0 0.0
        %378 = vmatpush1.msra.mxu0 0.0
        %379 = vmatprep.subr.mxu0 0.0
        %380 = vmatpush1.msra.mxu0 0.0
        %381 = vmatprep.subr.mxu0 0.0
        %382 = vmatpush1.msra.mxu0 0.0
        %383 = vmatprep.subr.mxu0 0.0
        %384 = vmatpush1.msra.mxu0 0.0
        %385 = vmatprep.subr.mxu0 0.0
        %386 = vmatpush1.msra.mxu0 0.0
        %387 = vmatprep.subr.mxu0 0.0
        %388 = vmatpush1.msra.mxu0 0.0
        %389 = vmatprep.subr.mxu0 0.0
        %390 = vmatpush1.msra.mxu0 0.0
        %391 = vmatprep.subr.mxu0 0.0
        %392 = vmatpush1.msra.mxu0 0.0
        %393 = vmatprep.subr.mxu0 0.0
        %394 = vmatpush1.msra.mxu0 0.0
        %395 = vmatprep.subr.mxu0 0.0
        %396 = vmatpush1.msra.mxu0 0.0
        %397 = vmatprep.mubr.f32.mxu0 0.0
        %398 = vmatmul.mubr.f32.gmra.mrb[0].mxu0 %v327
        %v399 = vpop.f32.mrb[0].mxu0
        %v400 = vadd.f32 0.0, %v399
        %v401 = vpop.f32.mrb[0].mxu0
        %402 = vdwg.mxu0
        %v403 = vld [vmem:[%s3] sm:$0xf]
        %v405 = vsel %vm325, %v403, 0
        %v408 = vsel %vm329, %v323, 0
        %410 = vmatprep.subr.mxu0 0.0
        %411 = vmatpush1.msra.mxu0 %v408
        %412 = vmatprep.subr.mxu0 0.0
        %413 = vmatpush1.msra.mxu0 0.0
        %414 = vmatprep.subr.mxu0 0.0
        %415 = vmatpush1.msra.mxu0 0.0
        %416 = vmatprep.subr.mxu0 0.0
        %417 = vmatpush1.msra.mxu0 0.0
        %418 = vmatprep.subr.mxu0 0.0
        %419 = vmatpush1.msra.mxu0 0.0
        %420 = vmatprep.subr.mxu0 0.0
        %421 = vmatpush1.msra.mxu0 0.0
        %422 = vmatprep.subr.mxu0 0.0
        %423 = vmatpush1.msra.mxu0 0.0
        %424 = vmatprep.subr.mxu0 0.0
        %425 = vmatpush1.msra.mxu0 0.0
        %426 = vmatprep.subr.mxu0 0.0
        %427 = vmatpush1.msra.mxu0 0.0
        %428 = vmatprep.subr.mxu0 0.0
        %429 = vmatpush1.msra.mxu0 0.0
        %430 = vmatprep.subr.mxu0 0.0
        %431 = vmatpush1.msra.mxu0 0.0
        %432 = vmatprep.subr.mxu0 0.0
        %433 = vmatpush1.msra.mxu0 0.0
        %434 = vmatprep.subr.mxu0 0.0
        %435 = vmatpush1.msra.mxu0 0.0
        %436 = vmatprep.subr.mxu0 0.0
        %437 = vmatpush1.msra.mxu0 0.0
        %438 = vmatprep.subr.mxu0 0.0
        %439 = vmatpush1.msra.mxu0 0.0
        %440 = vmatprep.subr.mxu0 0.0
        %441 = vmatpush1.msra.mxu0 0.0
        %442 = vmatprep.subr.mxu0 0.0
        %443 = vmatpush1.msra.mxu0 0.0
        %444 = vmatprep.subr.mxu0 0.0
        %445 = vmatpush1.msra.mxu0 0.0
        %446 = vmatprep.subr.mxu0 0.0
        %447 = vmatpush1.msra.mxu0 0.0
        %448 = vmatprep.subr.mxu0 0.0
        %449 = vmatpush1.msra.mxu0 0.0
        %450 = vmatprep.subr.mxu0 0.0
        %451 = vmatpush1.msra.mxu0 0.0
        %452 = vmatprep.subr.mxu0 0.0
        %453 = vmatpush1.msra.mxu0 0.0
        %454 = vmatprep.subr.mxu0 0.0
        %455 = vmatpush1.msra.mxu0 0.0
        %456 = vmatprep.subr.mxu0 0.0
        %457 = vmatpush1.msra.mxu0 0.0
        %458 = vmatprep.subr.mxu0 0.0
        %459 = vmatpush1.msra.mxu0 0.0
        %460 = vmatprep.subr.mxu0 0.0
        %461 = vmatpush1.msra.mxu0 0.0
        %462 = vmatprep.subr.mxu0 0.0
        %463 = vmatpush1.msra.mxu0 0.0
        %464 = vmatprep.subr.mxu0 0.0
        %465 = vmatpush1.msra.mxu0 0.0
        %466 = vmatprep.subr.mxu0 0.0
        %467 = vmatpush1.msra.mxu0 0.0
        %468 = vmatprep.subr.mxu0 0.0
        %469 = vmatpush1.msra.mxu0 0.0
        %470 = vmatprep.subr.mxu0 0.0
        %471 = vmatpush1.msra.mxu0 0.0
        %472 = vmatprep.subr.mxu0 0.0
        %473 = vmatpush1.msra.mxu0 0.0
        %474 = vmatprep.mubr.f32.mxu0 0.0
        %475 = vmatmul.mubr.f32.gmra.mrb[0].mxu0 %v405
        %v476 = vpop.f32.mrb[0].mxu0
        %v477 = vadd.f32 0.0, %v476
        %v478 = vpop.f32.mrb[0].mxu0
        %479 = vdwg.mxu0
        %vm480 = vcmask 519168
        %481 = vst.msk [vmem:[%s299] sm:$0xf] %vm480, %v400
        %s482 = scalar_lea.vmem %s299, 4 [#allocation7]
        %483 = vst.msk [vmem:[%s482] sm:$0xf] %vm480, %v477
        %v484 = vsel %vm480, %v400, 0.0
        %485 = vadd.xlane.f32.xlu0 %v484
        %v486 = vpop.xlane.xlu0 %485
        %v487 = vmul.f32 %v400, %v400
        %v488 = vsel %vm480, %v487, 0.0
        %489 = vadd.xlane.f32.xlu0 %v488
        %v490 = vpop.xlane.xlu0 %489
        %v491 = vsel %vm480, %v477, 0.0
        %492 = vadd.xlane.f32.xlu0 %v491
        %v493 = vpop.xlane.xlu0 %492
        %v494 = vmul.f32 %v477, %v477
        %v495 = vsel %vm480, %v494, 0.0
        %496 = vadd.xlane.f32.xlu0 %v495
        %v497 = vpop.xlane.xlu0 %496
        %vm498 = vcmask 7168
        %v499 = vsel %vm498, %v486, %v490
        %vm500 = vcmask 11264
        %501 = vst.msk [vmem:[%s319] sm:$0xf] %vm500, %v499
        %v502 = vsel %vm498, %v493, %v497
        %s503 = scalar_lea.vmem %s319, 4
        %504 = vst.msk [vmem:[%s503] sm:$0xf] %vm500, %v502
        %s505 = sand.u32 %s146, 1
        %s506 = scalar_lea.sflag [#allocation4], %s505
        %s507 = sand.u32 %s146, 1
        %s508 = smul.addr %s507, 8
        %s509 = scalar_lea.vmem [#allocation7], %s508
        %p510 = scmp.lt.s32.totalorder %s30, 1
        %s511 = scalar_select %p510, %s30, 1
        %p512 = scmp.lt.s32.totalorder %s31, 0
        %s513 = scalar_select %p512, %s31, 0
        %s514 = smul.addr %s513, 2
        %s515 = smul.addr %s511, 2
        %s516 = sadd.s32 %s514, %s515
        %s517 = smul.addr %s516, 4
        %s518 = scalar_lea.vmem %s5, %s517
        // Predicated region
        $region45: #{tpu_custom_call.1} parent=35 // pred_check
          %p519 = pneg %p156
        $region46: #{tpu_custom_call.1} parent=35 // pred_check_branch
          %521 = sbr.rel (%p519) target = $region48
        $region47: #{tpu_custom_call.1} parent=35 // pred_region
          %s523 = ssub.s32 128, 128
          %524 = vsyncadd %s506, %s523
          %s525 = smul.addr %s30, 2
          %s526 = sadd.s32 %s31, %s525
          %s527 = smul.addr %s526, 64
          %s528 = scalar_lea.hbm %s4, %s527
          %s529 = sshll.u32 %s509, 4
          %s530 = int_to_ptr.vmem [resolvable:$true] %s529
          %535 = dma.vmem_to_hbm [thread:$0]  %s530, 128, %s528, %s506, 64, 64, 4
        $region48: #{tpu_custom_call.1} parent=35 // pred_fallthru
          _
        // Predicated region
        $region49: #{tpu_custom_call.1} parent=35 // pred_check
          %p536 = pneg %p184
        $region50: #{tpu_custom_call.1} parent=35 // pred_check_branch
          %538 = sbr.rel (%p536) target = $region52
        $region51: #{tpu_custom_call.1} parent=35 // pred_region
          _
        $region52: #{tpu_custom_call.1} parent=35 // pred_fallthru
          _
      $region36: #{tpu_custom_call.1} parent=5 // pred_fallthru
        _
      %p539 = scmp.le.s32.totalorder 2, %s21
      // Predicated region
      $region53: #{tpu_custom_call.1} parent=5 // pred_check
        %p540 = pneg %p539
      $region54: #{tpu_custom_call.1} parent=5 // pred_check_branch
        %542 = sbr.rel (%p540) target = $region56
      $region55: #{tpu_custom_call.1} parent=5 // pred_region
        %s543 = ssub.s32 %s21, 2
        // Predicated region
        $region57: #{tpu_custom_call.1} parent=55 // pred_check
          %p544 = pneg %p162
        $region58: #{tpu_custom_call.1} parent=55 // pred_check_branch
          %546 = sbr.rel (%p544) target = $region60
        $region59: #{tpu_custom_call.1} parent=55 // pred_region
          %s547 = sand.u32 %s147, 1
          %s548 = scalar_lea.sflag [#allocation4], %s547
          %s549 = sand.u32 %s147, 1
          %s550 = smul.addr %s549, 8
          %s551 = scalar_lea.vmem [#allocation7], %s550
          %552 = dma.done %s548, 128
        $region60: #{tpu_custom_call.1} parent=55 // pred_fallthru
          _
        // Predicated region
        $region61: #{tpu_custom_call.1} parent=55 // pred_check
          %p553 = pneg %p190
        $region62: #{tpu_custom_call.1} parent=55 // pred_check_branch
          %555 = sbr.rel (%p553) target = $region64
        $region63: #{tpu_custom_call.1} parent=55 // pred_region
          %p556 = scmp.lt.s32.totalorder %s32, 1
          %s557 = scalar_select %p556, %s32, 1
          %p558 = scmp.lt.s32.totalorder %s33, 0
          %s559 = scalar_select %p558, %s33, 0
          %s560 = smul.addr %s559, 2
          %s561 = smul.addr %s557, 2
          %s562 = sadd.s32 %s560, %s561
          %s563 = smul.addr %s562, 4
          %s564 = scalar_lea.vmem %s5, %s563
        $region64: #{tpu_custom_call.1} parent=55 // pred_fallthru
          _
      $region56: #{tpu_custom_call.1} parent=5 // pred_fallthru
        _
    $region6: #{tpu_custom_call.1} parent=1 // loop_footer
      %s25 = sadd.s32 1, %s21
    $region7: #{tpu_custom_call.1} parent=1 // loop_footer_branch
      %20 = sbr.rel target = $region3
    $region8: #{tpu_custom_call.1} parent=1 // loop_exit
      _
    %565 = vsyncpa [#allocation3], 1
    %s566 = scalar_lea.sflag [#allocation3], 1
    %567 = vsyncpa %s566, 1
    %568 = vsyncpa [#allocation6], 1
    %s569 = scalar_lea.sflag [#allocation6], 1
    %570 = vsyncpa %s569, 1
    %571 = vsyncpa [#allocation4], 1
    %s572 = scalar_lea.sflag [#allocation4], 1
    %573 = vsyncpa %s572, 1

</llo_original>
